<compile_context>
chip_gen: v7x
topology: tpu7x:2x2x1
jax: 0.10.0
libtpu: 0.0.40
codegen_flags: <defaults>
</compile_context>

<pallas_src>
import functools

import jax
import jax.numpy as jnp
from jax.experimental import pallas as pl
from jax.experimental.pallas import tpu as pltpu

_LANES = 128
_SUBLANES = 8


def _mse_ssd_kernel(x_ref, y_ref, o_ref, *, rows, tm, blocks_per_split,
                    masked, bf16_diff):
    """Accumulates this block's sum((x-y)^2) into the (1,8,128) output block."""
    # grid = (num_splits [parallel], blocks_per_split [arbitrary reduction])
    i = pl.program_id(1)

    @pl.when(i == 0)
    def _():
        # Output block index is constant along axis 1 -> VMEM-resident
        # accumulator (no scratch buffer needed).
        o_ref[...] = jnp.zeros_like(o_ref)

    if bf16_diff:
        # v7x + bf16: subtract in packed bf16 (half the VALU work), square in f32.
        d = (x_ref[...] - y_ref[...]).astype(jnp.float32)
    else:
        # Upcast inside the kernel (halves HBM traffic for bf16 inputs).
        d = x_ref[...].astype(jnp.float32) - y_ref[...].astype(jnp.float32)
    sq = d * d

    if masked:
        # The globally-last block overhangs the (rows, 128) slab; zero the
        # ghost rows (VPU select, hidden under the streaming DMA).
        c = pl.program_id(0)
        row0 = (c * blocks_per_split + i) * tm
        ridx = row0 + jax.lax.broadcasted_iota(jnp.int32, (tm, _LANES), 0)
        sq = jnp.where(ridx < rows, sq, 0.0)

    # Reduce only along the row axis (pure VPU adds across vregs); the final
    # cross-lane reduction happens in the wrapper.
    o_ref[0] += jnp.sum(sq.reshape(-1, _SUBLANES, _LANES), axis=0)


def _device_kind() -> str:
    try:
        return (jax.devices()[0].device_kind or "").lower()
    except Exception:  # pragma: no cover - be robust on exotic backends
        return ""


def mse(x, y, *, normalization: bool = True, target_block_bytes: int | None = None,
        num_splits: int | None = None):
    """Scalar MSE loss matching the PyTorch MSE module's forward()."""
    assert x.shape == y.shape, "X and Y must have the same shape"
    n_elems = int(x.size)
    assert n_elems > 0

    # Folded affine: 255*((x+1)/2 - (y+1)/2) = 127.5*(x-y); 255*x-255*y = 255*(x-y)
    scale = 127.5 if normalization else 255.0
    scale2 = jnp.float32(scale * scale)

    xf = x.reshape(-1)
    yf = y.reshape(-1)
    itemsize = jnp.dtype(x.dtype).itemsize
    rows = n_elems // _LANES
    rem = n_elems - rows * _LANES

    # Degenerate inputs (< 1024 elements): not worth a kernel launch.
    if rows < _SUBLANES:
        d = xf.astype(jnp.float32) - yf.astype(jnp.float32)
        return (jnp.sum(d * d) * scale2 / jnp.float32(n_elems)).astype(jnp.float32)

    # ---- chip-aware defaults -------------------------------------------------
    kind = _device_kind()
    is_v7 = "v7" in kind
    big_vmem = any(v in kind for v in ("v3", "v4", "v5", "v6"))  # 128 MiB parts
    if num_splits is None:
        num_splits = 2 if is_v7 else 1          # parallel split only pays on 2-TC chips
    num_splits = max(1, int(num_splits))
    if target_block_bytes is None:
        target_block_bytes = (8 << 20) if big_vmem else (4 << 20)
    vmem_cap = (64 << 20) if big_vmem else (40 << 20)

    # ---- row tile: constant-byte blocks, packed-sublane aligned --------------
    row_pack = max(_SUBLANES, 32 // itemsize)   # 8 (f32) / 16 (bf16) / 32 (i8)
    tm = max(row_pack, target_block_bytes // (_LANES * itemsize))
    tm = -(-tm // row_pack) * row_pack
    per_split_rows = -(-rows // num_splits)
    if tm > per_split_rows:
        # Shrink to fit the input; 8-row multiple is the hard layout requirement.
        tm = max(_SUBLANES, (per_split_rows // _SUBLANES) * _SUBLANES)

    total_blocks = -(-rows // tm)
    if num_splits > 1 and total_blocks % num_splits != 0:
        num_splits = 1          # avoid ghost (fully out-of-bounds) blocks
    blocks_per_split = total_blocks // num_splits
    masked = (total_blocks * tm != rows)

    # ---- lane-dense slab (no padding copy) -----------------------------------
    main = rows * _LANES
    if rem:
        # Only the rare non-multiple-of-128 case slices the aligned prefix; the
        # <128-element tail is added with plain jnp below.
        x2 = xf[:main].reshape(rows, _LANES)
        y2 = yf[:main].reshape(rows, _LANES)
    else:
        x2 = xf.reshape(rows, _LANES)
        y2 = yf.reshape(rows, _LANES)

    block_bytes = tm * _LANES * itemsize
    # 2 inputs x 2 pipeline buffers + tiny resident output, plus headroom.
    vmem_needed = 2 * 2 * block_bytes + 2 * num_splits * _SUBLANES * _LANES * 4
    vmem_limit = int(min(max(vmem_needed + (4 << 20), 16 << 20), vmem_cap))

    bf16_diff = is_v7 and x2.dtype == jnp.bfloat16

    kernel = functools.partial(
        _mse_ssd_kernel, rows=rows, tm=tm, blocks_per_split=blocks_per_split,
        masked=masked, bf16_diff=bf16_diff)

    cost = pl.CostEstimate(
        flops=3 * rows * _LANES,
        transcendentals=0,
        bytes_accessed=2 * rows * _LANES * itemsize
        + num_splits * _SUBLANES * _LANES * 4,
    )

    partials = pl.pallas_call(
        kernel,
        out_shape=jax.ShapeDtypeStruct((num_splits, _SUBLANES, _LANES),
                                       jnp.float32),
        grid_spec=pltpu.PrefetchScalarGridSpec(
            num_scalar_prefetch=0,
            grid=(num_splits, blocks_per_split),
            in_specs=[
                pl.BlockSpec((tm, _LANES),
                             lambda c, i: (c * blocks_per_split + i, 0)),
                pl.BlockSpec((tm, _LANES),
                             lambda c, i: (c * blocks_per_split + i, 0)),
            ],
            out_specs=pl.BlockSpec((1, _SUBLANES, _LANES),
                                   lambda c, i: (c, 0, 0)),
        ),
        compiler_params=pltpu.CompilerParams(
            # TODO(synk): on v7x verify "parallel" shards axis 0 across both
            # TensorCores (xprof per-core timeline); else use pltpu.CORE_PARALLEL.
            dimension_semantics=("parallel", "arbitrary"),
            vmem_limit_bytes=vmem_limit,
        ),
        cost_estimate=cost,
    )(x2, y2)

    ssd = jnp.sum(partials, dtype=jnp.float32)
    if rem:
        dt = xf[main:].astype(jnp.float32) - yf[main:].astype(jnp.float32)
        ssd = ssd + jnp.sum(dt * dt)
    return (ssd * scale2 / jnp.float32(n_elems)).astype(jnp.float32)


def _reference_mse(x, y, normalization=True):
    x = x.astype(jnp.float32)
    y = y.astype(jnp.float32)
    if normalization:
        x = (x + 1.0) / 2.0
        y = (y + 1.0) / 2.0
    return jnp.mean((x * 255.0 - y * 255.0) ** 2)


if __name__ == "__main__":
    key = jax.random.PRNGKey(0)
    kx, ky, kx2, ky2 = jax.random.split(key, 4)

    # NCHW inputs, same convention as PyTorch.
    x = jax.random.uniform(kx, (2, 4, 16, 16), jnp.float32, -1.0, 1.0)
    y = jax.random.uniform(ky, (2, 4, 16, 16), jnp.float32, -1.0, 1.0)
    out = jax.block_until_ready(mse(x, y, normalization=True))
    ref = _reference_mse(x, y, normalization=True)
    assert jnp.allclose(out, ref, rtol=1e-5, atol=1e-3), (out, ref)

    # Ragged element count (not a multiple of 128): exercises the in-kernel
    # row mask and the <128-element jnp tail (no jnp.pad anywhere).
    xr = jax.random.uniform(kx2, (2, 3, 17, 13), jnp.float32, -1.0, 1.0)
    yr = jax.random.uniform(ky2, (2, 3, 17, 13), jnp.float32, -1.0, 1.0)
    out_r = jax.block_until_ready(mse(xr, yr, normalization=False))
    ref_r = _reference_mse(xr, yr, normalization=False)
    assert jnp.allclose(out_r, ref_r, rtol=1e-5, atol=1e-3), (out_r, ref_r)

    # bf16 inputs: in-kernel upcast (half the HBM bytes), packed 16-row tiles.
    xb = x.astype(jnp.bfloat16)
    yb = y.astype(jnp.bfloat16)
    out_b = jax.block_until_ready(mse(xb, yb, normalization=True))
    ref_b = _reference_mse(xb, yb, normalization=True)
    assert jnp.allclose(out_b, ref_b, rtol=2e-2, atol=1.0), (out_b, ref_b)

    print("KERNEL_OK")
</pallas_src>

<mosaic_0001>
module attributes {stable_mosaic.version = 11 : i64} {
  func.func @_mse_ssd_kernel(%arg0: i32, %arg1: i32, %arg2: memref<16x128xf32, #tpu.memory_space<vmem>>, %arg3: memref<16x128xf32, #tpu.memory_space<vmem>>, %arg4: memref<1x8x128xf32, #tpu.memory_space<vmem>>) attributes {dimension_semantics = [#tpu.dimension_semantics<parallel>, #tpu.dimension_semantics<arbitrary>], iteration_bounds = array<i64: 1, 1>, scalar_prefetch = 0 : i64, scratch_operands = 0 : i64, tpu.core_type = #tpu.core_type<tc>, window_params = [{transform_indices = @transform_0, window_bounds = array<i64: 16, 128>}, {transform_indices = @transform_1, window_bounds = array<i64: 16, 128>}, {transform_indices = @transform_2, window_bounds = array<i64: 1, 8, 128>}]} {
    %c0_i32 = arith.constant 0 : i32
    %0 = arith.cmpi eq, %arg1, %c0_i32 : i32
    %1 = arith.extui %0 : i1 to i32
    %c0_i32_0 = arith.constant 0 : i32
    %2 = arith.cmpi ne, %1, %c0_i32_0 : i32
    scf.if %2 {
      %cst_10 = arith.constant 0.000000e+00 : f32
      %15 = vector.broadcast %cst_10 : f32 to vector<1x8x128xf32>
      %c0_11 = arith.constant 0 : index
      %c0_12 = arith.constant 0 : index
      %c0_13 = arith.constant 0 : index
      %16 = vector.load %arg4[%c0_11, %c0_12, %c0_13] : memref<1x8x128xf32, #tpu.memory_space<vmem>>, vector<1x8x128xf32>
      tpu.vector_store %arg4[%c0_11, %c0_12, %c0_13], %15 {strides = array<i32>} : memref<1x8x128xf32, #tpu.memory_space<vmem>>, vector<1x8x128xf32>,
    } else {
    }
    %c0 = arith.constant 0 : index
    %c0_1 = arith.constant 0 : index
    %3 = vector.load %arg2[%c0, %c0_1] : memref<16x128xf32, #tpu.memory_space<vmem>>, vector<16x128xf32>
    %c0_2 = arith.constant 0 : index
    %c0_3 = arith.constant 0 : index
    %4 = vector.load %arg3[%c0_2, %c0_3] : memref<16x128xf32, #tpu.memory_space<vmem>>, vector<16x128xf32>
    %5 = arith.subf %3, %4 : vector<16x128xf32>
    %6 = arith.mulf %5, %5 : vector<16x128xf32>
    %c0_4 = arith.constant 0 : index
    %c0_5 = arith.constant 0 : index
    %c0_6 = arith.constant 0 : index
    %7 = vector.load %arg4[%c0_4, %c0_5, %c0_6] : memref<1x8x128xf32, #tpu.memory_space<vmem>>, vector<1x8x128xf32>
    %8 = vector.shape_cast %7 : vector<1x8x128xf32> to vector<8x128xf32>
    %9 = vector.shape_cast %6 : vector<16x128xf32> to vector<2x8x128xf32>
    %cst = arith.constant dense<0.000000e+00> : vector<8x128xf32>
    %10 = vector.multi_reduction <add>, %9, %cst [0] : vector<2x8x128xf32> to vector<8x128xf32>
    %11 = arith.addf %8, %10 : vector<8x128xf32>
    %c0_7 = arith.constant 0 : index
    %c0_8 = arith.constant 0 : index
    %c0_9 = arith.constant 0 : index
    %12 = vector.load %arg4[%c0_7, %c0_8, %c0_9] : memref<1x8x128xf32, #tpu.memory_space<vmem>>, vector<1x8x128xf32>
    %13 = vector.shape_cast %12 : vector<1x8x128xf32> to vector<8x128xf32>
    %14 = vector.shape_cast %11 : vector<8x128xf32> to vector<1x8x128xf32>
    tpu.vector_store %arg4[%c0_7, %c0_8, %c0_9], %14 {strides = array<i32>} : memref<1x8x128xf32, #tpu.memory_space<vmem>>, vector<1x8x128xf32>,
    return
  }
  func.func @transform_0(%arg0: i32, %arg1: i32) -> (i32, i32) {
    %c1_i32 = arith.constant 1 : i32
    %0 = arith.muli %arg0, %c1_i32 : i32
    %1 = arith.addi %0, %arg1 : i32
    %c0_i32 = arith.constant 0 : i32
    %c0_i32_0 = arith.constant 0 : i32
    return %1, %c0_i32 : i32, i32
  }
  func.func @transform_1(%arg0: i32, %arg1: i32) -> (i32, i32) {
    %c1_i32 = arith.constant 1 : i32
    %0 = arith.muli %arg0, %c1_i32 : i32
    %1 = arith.addi %0, %arg1 : i32
    %c0_i32 = arith.constant 0 : i32
    %c0_i32_0 = arith.constant 0 : i32
    return %1, %c0_i32 : i32, i32
  }
  func.func @transform_2(%arg0: i32, %arg1: i32) -> (i32, i32, i32) {
    %c0_i32 = arith.constant 0 : i32
    %c0_i32_0 = arith.constant 0 : i32
    %c0_i32_1 = arith.constant 0 : i32
    return %arg0, %c0_i32, %c0_i32_0 : i32, i32, i32
  }
}

</mosaic_0001>

<llo_original>
// kernel: tpu_custom_call.1
$region0: #{tpu_custom_call.1}
  #allocation0 [shape = 'u32[]', space=smem, size = 0x4, offset = 0x4, fixed_abs, tag = 'smem constant byte address 0x4 - core index']
  #allocation1 [shape = 'u32[144,128]{1,0:T(1,128)}', space=vmem, size = 0x12000, scoped, tag = 'internal scratch']
  %s0 = inlined_call_operand.hbm [shape: f32[16,128], index: 0, kind: input, shape index: {}]
  %s1 = inlined_call_operand.hbm [shape: f32[16,128], index: 1, kind: input, shape index: {}]
  %s2 = inlined_call_operand.hbm [shape: f32[1,8,128], index: 2, kind: output, shape index: {}]
  %s3 = sld [smem:[#allocation0]]
  $region30: #{tpu_custom_call.1} parent=0
    _
  %s5 = ssub.s32 1, %s3
  %s6 = scalar_select 0, %s5, %s3
  $region1: #{tpu_custom_call.1} parent=0
    #allocation2 [shape = 'u8[8192]{0}', space=vmem, size = 0x2000, scoped, tag = 'input window, operand 0, single buffered']
    #allocation3 [shape = 's32[1]{0}', space=sflag, size = 0x4, scoped, tag = 'scoped memory for tpu_custom_call.1']
    #allocation4 [shape = 's32[1]{0}', space=sflag, size = 0x4, scoped, tag = 'scoped memory for tpu_custom_call.1']
    #allocation5 [shape = 'u8[8192]{0}', space=vmem, size = 0x2000, scoped, tag = 'input window, operand 1, single buffered']
    #allocation6 [shape = 's32[1]{0}', space=sflag, size = 0x4, scoped, tag = 'scoped memory for tpu_custom_call.1']
    #allocation7 [shape = 'u8[4096]{0}', space=vmem, size = 0x1000, scoped, tag = 'output window, operand 0, single buffered']
    %7 = vsyncpa [#allocation3], 0
    %8 = vsyncpa [#allocation6], 0
    %9 = vsyncpa [#allocation4], 0
    // Predicated region
    $region2: #{tpu_custom_call.1} parent=1 // pred_check
      _
    $region3: #{tpu_custom_call.1} parent=1 // pred_check_branch
      %11 = sbr.rel (0) target = $region5
    $region4: #{tpu_custom_call.1} parent=1 // pred_region
      %s12 = sadd.s32 0, 0
      %s13 = smul.u32 2, %s12
      %s15 = ssub.s32 256, 256
      %16 = vsyncadd [#allocation3], %s15
      %s17 = smul.addr %s13, 128
      %s18 = scalar_lea.hbm %s0, %s17
      %s19 = sshll.u32 [#allocation2], 4
      %s20 = int_to_ptr.vmem [resolvable:$true] %s19
      %25 = dma.hbm_to_vmem [thread:$0]  %s18, 256, %s20, [#allocation3], 128, 128, 8
    $region5: #{tpu_custom_call.1} parent=1 // pred_fallthru
      _
    // Predicated region
    $region6: #{tpu_custom_call.1} parent=1 // pred_check
      _
    $region7: #{tpu_custom_call.1} parent=1 // pred_check_branch
      %27 = sbr.rel (0) target = $region9
    $region8: #{tpu_custom_call.1} parent=1 // pred_region
      %s28 = sadd.s32 0, 0
      %s29 = smul.u32 2, %s28
      %s31 = ssub.s32 256, 256
      %32 = vsyncadd [#allocation6], %s31
      %s33 = smul.addr %s29, 128
      %s34 = scalar_lea.hbm %s1, %s33
      %s35 = sshll.u32 [#allocation5], 4
      %s36 = int_to_ptr.vmem [resolvable:$true] %s35
      %41 = dma.hbm_to_vmem [thread:$0]  %s34, 256, %s36, [#allocation6], 128, 128, 8
    $region9: #{tpu_custom_call.1} parent=1 // pred_fallthru
      _
    // Predicated region
    $region10: #{tpu_custom_call.1} parent=1 // pred_check
      _
    $region11: #{tpu_custom_call.1} parent=1 // pred_check_branch
      %43 = sbr.rel (0) target = $region13
    $region12: #{tpu_custom_call.1} parent=1 // pred_region
      %44 = dma.done [#allocation3], 256
    $region13: #{tpu_custom_call.1} parent=1 // pred_fallthru
      _
    // Predicated region
    $region14: #{tpu_custom_call.1} parent=1 // pred_check
      _
    $region15: #{tpu_custom_call.1} parent=1 // pred_check_branch
      %46 = sbr.rel (0) target = $region17
    $region16: #{tpu_custom_call.1} parent=1 // pred_region
      %47 = dma.done [#allocation6], 256
    $region17: #{tpu_custom_call.1} parent=1 // pred_fallthru
      _
    %s48 = sadd.s32 0, 0
    %s49 = smul.u32 2, %s48
    %s50 = sadd.s32 0, 0
    %s51 = smul.u32 2, %s50
    %p52 = scmp.eq.s32.totalorder 0, 0
    // Predicated region
    $region18: #{tpu_custom_call.1} parent=1 // pred_check
      %p53 = pneg %p52
    $region19: #{tpu_custom_call.1} parent=1 // pred_check_branch
      %55 = sbr.rel (%p53) target = $region21
    $region20: #{tpu_custom_call.1} parent=1 // pred_region
      %56 = vst [vmem:[#allocation7] sm:$0xff] 0.0
    $region21: #{tpu_custom_call.1} parent=1 // pred_fallthru
      _
    %v57 = vld [vmem:[#allocation2] sm:$0xff]
    %v58 = vld [vmem:[#allocation2 + $0x8] sm:$0xff]
    %v59 = vld [vmem:[#allocation5] sm:$0xff]
    %v60 = vld [vmem:[#allocation5 + $0x8] sm:$0xff]
    %v61 = vsub.f32 %v57, %v59
    %v62 = vsub.f32 %v58, %v60
    %v63 = vmul.f32 %v61, %v61
    %v64 = vmul.f32 %v62, %v62
    %v65 = vld [vmem:[#allocation7] sm:$0xff]
    %v66 = vadd.f32 %v63, %v64
    %v67 = vadd.f32 %v65, %v66
    %68 = vst [vmem:[#allocation7] sm:$0xff] %v67
    // Predicated region
    $region22: #{tpu_custom_call.1} parent=1 // pred_check
      _
    $region23: #{tpu_custom_call.1} parent=1 // pred_check_branch
      %70 = sbr.rel (0) target = $region25
    $region24: #{tpu_custom_call.1} parent=1 // pred_region
      %s72 = ssub.s32 128, 128
      %73 = vsyncadd [#allocation4], %s72
      %s75 = sshll.u32 [#allocation7], 4
      %s76 = int_to_ptr.vmem [resolvable:$true] %s75
      %78 = dma.vmem_to_hbm [thread:$0]  %s76, 128, %s2, [#allocation4]
    $region25: #{tpu_custom_call.1} parent=1 // pred_fallthru
      _
    // Predicated region
    $region26: #{tpu_custom_call.1} parent=1 // pred_check
      _
    $region27: #{tpu_custom_call.1} parent=1 // pred_check_branch
      %80 = sbr.rel (0) target = $region29
    $region28: #{tpu_custom_call.1} parent=1 // pred_region
      %81 = dma.done [#allocation4], 128
    $region29: #{tpu_custom_call.1} parent=1 // pred_fallthru
      _
    %82 = vsyncpa [#allocation3], 1
    %83 = vsyncpa [#allocation6], 1
    %84 = vsyncpa [#allocation4], 1

</llo_original>
